<compile_context>
chip_gen: v6e
topology: v6e:2x2x1
jax: 0.10.0
libtpu: 0.0.40
codegen_flags: <defaults>
</compile_context>

<pallas_src>
import functools

import jax
import jax.numpy as jnp
from jax import lax
from jax.experimental import pallas as pl
from jax.experimental.pallas import tpu as pltpu


def _leaky(x, slope=0.1):
    return jnp.where(x > 0, x, slope * x)


def _round_up(x, m):
    return ((x + m - 1) // m) * m


def _choose_block(n, *, cap=2048, min_grid=2, align=8):
    """Batch-tile picker: block multiple of `align`, >= min_grid grid steps (keeps both
    v7x TensorCores busy under dimension_semantics=("parallel",)), and at most
    align*grid rows of padding waste (vs. up to block-1 with round_up(n, block))."""
    cap = max(align, cap)
    grid = max(min_grid, -(-n // cap))
    block = _round_up(-(-n // grid), align)
    return block, grid * block


# --------------------------------------------------------------------------
# k-hot path
# --------------------------------------------------------------------------

def _khot_kernel(idx_ref, t1f_ref, bmid_ref, wf2_ref, bf2_ref, out_ref, *,
                 num_attrs, n_pad):
    tb = out_ref.shape[0]
    width = num_attrs * n_pad
    wdtype = t1f_ref.dtype

    # Concatenated one-hot [tb, K*n_pad] built on the VPU from int32 indices.
    # Each attribute owns a disjoint lane block, so a sum of compares is exact.
    # 0/1 are exact in bf16, so the MXU LHS loses no precision.
    lane = lax.broadcasted_iota(jnp.int32, (tb, width), 1)
    kh = jnp.zeros((tb, width), wdtype)
    for k in range(num_attrs):                               # static, tiny K
        target = idx_ref[:, k:k + 1] + k * n_pad             # [tb, 1] int32
        kh = kh + (lane == target).astype(wdtype)

    # 1) fused [Embedding -> Linear1 -> LeakyReLU -> Linear2 -> fc.Linear1]:
    #    one matmul against the pack-time table t1f = leaky(t1) @ wmid.
    f = jnp.dot(kh, t1f_ref[...], preferred_element_type=jnp.float32) + bmid_ref[...]
    f = _leaky(f)

    # 2) fc.Linear2 -> lane-dense (128-multiple) output.
    out = jnp.dot(f.astype(wdtype), wf2_ref[...],
                  preferred_element_type=jnp.float32) + bf2_ref[...]
    out_ref[...] = out.astype(out_ref.dtype)


def attribute_embedding_khot(idx, packed, *, block_cap=2048, out_dtype=jnp.float32):
    """idx: [B, K] int32 attribute values. Returns [B, output_size] in out_dtype.

    Note: out-of-range indices yield a zero embedding row (the one-hot matches nothing)
    instead of raising like torch.nn.Embedding. out_dtype=bfloat16 halves writeback on
    v5e if the consumer tolerates it."""
    B, K = idx.shape
    n_pad = packed["n_pad"]
    t1f, bmid, wf2, bf2 = packed["t1f"], packed["bmid"], packed["wf2"], packed["bf2"]
    out_pad = wf2.shape[1]

    block_b, b_pad = _choose_block(B, cap=block_cap)
    idx_p = idx.astype(jnp.int32)
    if b_pad != B:
        idx_p = jnp.pad(idx_p, ((0, b_pad - B), (0, 0)))

    kernel = functools.partial(_khot_kernel, num_attrs=K, n_pad=n_pad)

    out = pl.pallas_call(
        kernel,
        out_shape=jax.ShapeDtypeStruct((b_pad, out_pad), out_dtype),
        grid=(b_pad // block_b,),
        in_specs=[
            pl.BlockSpec((block_b, K), lambda i: (i, 0)),    # indices, batch-tiled
            pl.BlockSpec(t1f.shape, lambda i: (0, 0)),       # weights: VMEM-resident
            pl.BlockSpec(bmid.shape, lambda i: (0, 0)),
            pl.BlockSpec(wf2.shape, lambda i: (0, 0)),
            pl.BlockSpec(bf2.shape, lambda i: (0, 0)),
        ],
        out_specs=pl.BlockSpec((block_b, out_pad), lambda i: (i, 0)),
        compiler_params=pltpu.CompilerParams(dimension_semantics=("parallel",)),
    )(idx_p, t1f, bmid, wf2, bf2)
    return out[:B, :packed["out_dim"]]


def pack_khot_params(raw, attr_dims, hidden_size, *, dtype=jnp.bfloat16, lane=128):
    """Exact, one-time parameter fusion (does not change the forward function)."""
    K = len(attr_dims)
    H = hidden_size
    n_pad = max(attr_dims)
    out_dim = raw["wf2"].shape[1]
    out_pad = _round_up(out_dim, lane)

    # Block-diagonal fused Embedding+Linear1 (+bias folded: one-hot rows sum to 1).
    t1 = jnp.zeros((K * n_pad, K * H), jnp.float32)
    # BlockDiag(Linear2) @ fc.Linear1 (no nonlinearity between them -> exact fusion).
    wmid = jnp.zeros((K * H, H), jnp.float32)
    for k, n in enumerate(attr_dims):
        blk = raw["emb"][k] @ raw["w1"][k] + raw["b1"][k][None, :]        # [n_k, H]
        t1 = t1.at[k * n_pad:k * n_pad + n, k * H:(k + 1) * H].set(blk)
        wmid = wmid.at[k * H:(k + 1) * H, :].set(
            raw["w2"][k] @ raw["wf1"][k * H:(k + 1) * H, :])

    # EXACT fold of the first LeakyReLU: each element of (onehot @ t1) equals exactly
    # one t1 entry, so leaky(onehot @ t1) == onehot @ leaky(t1), hence
    # leaky(onehot @ t1) @ wmid == onehot @ (leaky(t1) @ wmid).
    t1f = _leaky(t1) @ wmid                                               # [K*n_pad, H]

    b2_cat = jnp.concatenate(raw["b2"], axis=0)[None, :]                  # [1, K*H]
    bmid = b2_cat @ raw["wf1"] + raw["bf1"][None, :]                      # [1, H]

    # Lane-dense final output: pad out dim to a multiple of 128 (unmasked stores);
    # the wrapper slices the padding back off.
    wf2 = jnp.zeros((H, out_pad), jnp.float32).at[:, :out_dim].set(raw["wf2"])
    bf2 = jnp.zeros((1, out_pad), jnp.float32).at[:, :out_dim].set(raw["bf2"][None, :])

    return dict(n_pad=n_pad, out_dim=out_dim,
                t1f=t1f.astype(dtype),          # MXU operands in bf16 (or f32)
                wf2=wf2.astype(dtype),
                bmid=bmid, bf2=bf2)             # biases stay f32 (VPU adds)


def make_khot_params(key, attr_dims, embed_size, hidden_size, output_size):
    """Raw (unfused) parameters, weights stored [in, out] (x @ W convention)."""
    def emb_init(k, n, d):
        return ((2.0 / (n + d)) ** 0.5) * jax.random.normal(k, (n, d), jnp.float32)

    def lin_w(k, din, dout):
        # TODO(synk): spec uses orthogonal init (gain sqrt(2)); scaled normal here —
        # the init scheme does not change the forward math being verified.
        return ((2.0 / din) ** 0.5) * jax.random.normal(k, (din, dout), jnp.float32)

    def lin_b(k, dout):
        # Spec inits biases to 0; small nonzero values exercise the fused-bias paths.
        return 0.1 * jax.random.normal(k, (dout,), jnp.float32)

    K = len(attr_dims)
    emb, w1, b1, w2, b2 = [], [], [], [], []
    for i, n in enumerate(attr_dims):
        k0, k1, k2, k3, k4 = jax.random.split(jax.random.fold_in(key, i), 5)
        emb.append(emb_init(k0, n, embed_size))
        w1.append(lin_w(k1, embed_size, hidden_size))
        b1.append(lin_b(k2, hidden_size))
        w2.append(lin_w(k3, hidden_size, hidden_size))
        b2.append(lin_b(k4, hidden_size))
    k5, k6, k7, k8 = jax.random.split(jax.random.fold_in(key, 1000), 4)
    wf1 = lin_w(k5, K * hidden_size, hidden_size)
    bf1 = lin_b(k6, hidden_size)
    wf2 = lin_w(k7, hidden_size, output_size)
    bf2 = lin_b(k8, output_size)
    return dict(emb=emb, w1=w1, b1=b1, w2=w2, b2=b2,
                wf1=wf1, bf1=bf1, wf2=wf2, bf2=bf2)


def khot_reference(idx, raw, attr_dims):
    """Pure-JAX reference replicating the original (unfused) PyTorch forward."""
    outs = []
    for k in range(len(attr_dims)):
        e = raw["emb"][k][idx[:, k]]
        h = _leaky(e @ raw["w1"][k] + raw["b1"][k])
        outs.append(h @ raw["w2"][k] + raw["b2"][k])
    cat = jnp.concatenate(outs, axis=-1)
    f = _leaky(cat @ raw["wf1"] + raw["bf1"])
    return f @ raw["wf2"] + raw["bf2"]


# --------------------------------------------------------------------------
# one-hot path (single Embedding lookup), lane-dense grouped output
# --------------------------------------------------------------------------

def _onehot_kernel(idx_ref, tblk_ref, out_ref, *, group, num_values):
    rows = out_ref.shape[0]
    width = group * num_values
    wdtype = tblk_ref.dtype
    lane = lax.broadcasted_iota(jnp.int32, (rows, width), 1)
    oh = jnp.zeros((rows, width), wdtype)
    for g in range(group):
        target = idx_ref[:, g:g + 1] + g * num_values
        oh = oh + (lane == target).astype(wdtype)
    out_ref[...] = jnp.dot(oh, tblk_ref[...],
                           preferred_element_type=jnp.float32).astype(out_ref.dtype)


def pack_onehot_table(table, *, dtype=jnp.bfloat16, lane=128):
    """Group G = lane//E batch rows per output row via a block-diagonal [G*N, G*E]
    table so the kernel's output last dim is lane-dense (unmasked stores)."""
    N, E = table.shape
    G = lane // E if (E < lane and lane % E == 0) else 1
    tblk = jnp.zeros((G * N, G * E), table.dtype)
    for g in range(G):
        tblk = tblk.at[g * N:(g + 1) * N, g * E:(g + 1) * E].set(table)
    return dict(tblk=tblk.astype(dtype), group=G, num_values=N, embed_size=E)


def attribute_embedding_onehot(idx, packed, *, block_cap=2048, out_dtype=jnp.float32):
    """idx: [B] int32 joint-assignment ids. Returns [B, embed_size]."""
    # TODO(synk): for very large N, switch to a scalar-prefetch row gather
    # (PrefetchScalarGridSpec + pl.Element) instead of an in-VMEM one-hot matmul.
    G, N, E = packed["group"], packed["num_values"], packed["embed_size"]
    tblk = packed["tblk"]
    B = idx.shape[0]

    rows = -(-B // G)                                    # grouped rows needed
    block_rows, rows_pad = _choose_block(rows, cap=max(8, block_cap // G))
    b_pad = rows_pad * G

    idx1 = idx.astype(jnp.int32)
    if b_pad != B:
        idx1 = jnp.pad(idx1, (0, b_pad - B))
    idx2 = idx1.reshape(rows_pad, G)

    kernel = functools.partial(_onehot_kernel, group=G, num_values=N)
    out = pl.pallas_call(
        kernel,
        out_shape=jax.ShapeDtypeStruct((rows_pad, G * E), out_dtype),
        grid=(rows_pad // block_rows,),
        in_specs=[pl.BlockSpec((block_rows, G), lambda i: (i, 0)),
                  pl.BlockSpec(tblk.shape, lambda i: (0, 0))],
        out_specs=pl.BlockSpec((block_rows, G * E), lambda i: (i, 0)),
        compiler_params=pltpu.CompilerParams(dimension_semantics=("parallel",)),
    )(idx2, tblk)
    return out.reshape(rows_pad * G, E)[:B]


# --------------------------------------------------------------------------

if __name__ == "__main__":
    key = jax.random.PRNGKey(0)
    k_param, k_idx, k_tab, k_idx1 = jax.random.split(key, 4)

    # ---- k-hot path: K=3 attributes, cardinalities (4, 6, 8) ----
    attr_dims = (4, 6, 8)
    EMBED, HIDDEN, OUT = 32, 64, 128
    B = 8

    raw = make_khot_params(k_param, attr_dims, EMBED, HIDDEN, OUT)
    idx_cols = [
        jax.random.randint(jax.random.fold_in(k_idx, k), (B,), 0, n, dtype=jnp.int32)
        for k, n in enumerate(attr_dims)
    ]
    idx = jnp.stack(idx_cols, axis=1)                        # [B, K] int32

    ref = khot_reference(idx, raw, attr_dims)

    # f32-packed path: verifies the pack-time fusions are exact (only fp reassociation).
    packed_f32 = pack_khot_params(raw, attr_dims, HIDDEN, dtype=jnp.float32)
    out_f32 = jax.block_until_ready(attribute_embedding_khot(idx, packed_f32))
    assert out_f32.shape == (B, OUT)
    assert jnp.allclose(out_f32, ref, atol=2e-4, rtol=2e-4), \
        float(jnp.max(jnp.abs(out_f32 - ref)))

    # bf16-packed path (default): MXU-native operands; looser tolerance covers the
    # ~2^-8 relative weight rounding.
    packed_bf16 = pack_khot_params(raw, attr_dims, HIDDEN)
    out_bf16 = jax.block_until_ready(attribute_embedding_khot(idx, packed_bf16))
    assert out_bf16.shape == (B, OUT)
    assert jnp.allclose(out_bf16, ref, atol=5e-2, rtol=5e-2), \
        float(jnp.max(jnp.abs(out_bf16 - ref)))

    # ---- one-hot path: single table of N=24 joint assignments ----
    N = 24
    table = ((2.0 / (N + EMBED)) ** 0.5) * jax.random.normal(k_tab, (N, EMBED),
                                                             jnp.float32)
    idx1 = jax.random.randint(k_idx1, (B,), 0, N, dtype=jnp.int32)
    packed_tab = pack_onehot_table(table)
    emb = jax.block_until_ready(attribute_embedding_onehot(idx1, packed_tab))
    assert emb.shape == (B, EMBED)
    ref1 = table.astype(jnp.bfloat16).astype(jnp.float32)[idx1]   # lookup is exact
    assert jnp.allclose(emb, ref1, atol=1e-6), float(jnp.max(jnp.abs(emb - ref1)))

    print("KERNEL_OK")
</pallas_src>

<mosaic_0001>
module attributes {stable_mosaic.version = 11 : i64} {
  func.func @_khot_kernel(%arg0: i32, %arg1: memref<8x3xi32, #tpu.memory_space<vmem>>, %arg2: memref<24x64xf32, #tpu.memory_space<vmem>>, %arg3: memref<1x64xf32, #tpu.memory_space<vmem>>, %arg4: memref<64x128xf32, #tpu.memory_space<vmem>>, %arg5: memref<1x128xf32, #tpu.memory_space<vmem>>, %arg6: memref<8x128xf32, #tpu.memory_space<vmem>>) attributes {dimension_semantics = [#tpu.dimension_semantics<parallel>], iteration_bounds = array<i64: 2>, scalar_prefetch = 0 : i64, scratch_operands = 0 : i64, tpu.core_type = #tpu.core_type<tc>, window_params = [{transform_indices = @transform_0, window_bounds = array<i64: 8, 3>}, {pipeline_mode = #tpu.pipeline_mode<synchronous>, transform_indices = @transform_1, window_bounds = array<i64: 24, 64>}, {pipeline_mode = #tpu.pipeline_mode<synchronous>, transform_indices = @transform_2, window_bounds = array<i64: 1, 64>}, {pipeline_mode = #tpu.pipeline_mode<synchronous>, transform_indices = @transform_3, window_bounds = array<i64: 64, 128>}, {pipeline_mode = #tpu.pipeline_mode<synchronous>, transform_indices = @transform_4, window_bounds = array<i64: 1, 128>}, {transform_indices = @transform_5, window_bounds = array<i64: 8, 128>}]} {
    %0 = tpu.iota {dimensions = array<i32: 1>} : vector<8x24xi32>
    %cst = arith.constant 0.000000e+00 : f32
    %1 = vector.broadcast %cst : f32 to vector<8x24xf32>
    %c0 = arith.constant 0 : index
    %c0_0 = arith.constant 0 : index
    %2 = vector.load %arg1[%c0, %c0_0] : memref<8x3xi32, #tpu.memory_space<vmem>>, vector<8x1xi32>
    %c0_i32 = arith.constant 0 : i32
    %3 = vector.broadcast %c0_i32 : i32 to vector<8x1xi32>
    %4 = arith.addi %2, %3 : vector<8x1xi32>
    %5 = vector.broadcast %4 : vector<8x1xi32> to vector<8x24xi32>
    %6 = arith.cmpi eq, %0, %5 : vector<8x24xi32>
    %7 = arith.extui %6 : vector<8x24xi1> to vector<8x24xi32>
    %8 = arith.sitofp %7 : vector<8x24xi32> to vector<8x24xf32>
    %9 = arith.addf %1, %8 : vector<8x24xf32>
    %c0_1 = arith.constant 0 : index
    %c1 = arith.constant 1 : index
    %10 = vector.load %arg1[%c0_1, %c1] : memref<8x3xi32, #tpu.memory_space<vmem>>, vector<8x1xi32>
    %c8_i32 = arith.constant 8 : i32
    %11 = vector.broadcast %c8_i32 : i32 to vector<8x1xi32>
    %12 = arith.addi %10, %11 : vector<8x1xi32>
    %13 = vector.broadcast %12 : vector<8x1xi32> to vector<8x24xi32>
    %14 = arith.cmpi eq, %0, %13 : vector<8x24xi32>
    %15 = arith.extui %14 : vector<8x24xi1> to vector<8x24xi32>
    %16 = arith.sitofp %15 : vector<8x24xi32> to vector<8x24xf32>
    %17 = arith.addf %9, %16 : vector<8x24xf32>
    %c0_2 = arith.constant 0 : index
    %c2 = arith.constant 2 : index
    %18 = vector.load %arg1[%c0_2, %c2] : memref<8x3xi32, #tpu.memory_space<vmem>>, vector<8x1xi32>
    %c16_i32 = arith.constant 16 : i32
    %19 = vector.broadcast %c16_i32 : i32 to vector<8x1xi32>
    %20 = arith.addi %18, %19 : vector<8x1xi32>
    %21 = vector.broadcast %20 : vector<8x1xi32> to vector<8x24xi32>
    %22 = arith.cmpi eq, %0, %21 : vector<8x24xi32>
    %23 = arith.extui %22 : vector<8x24xi1> to vector<8x24xi32>
    %24 = arith.sitofp %23 : vector<8x24xi32> to vector<8x24xf32>
    %25 = arith.addf %17, %24 : vector<8x24xf32>
    %c0_3 = arith.constant 0 : index
    %c0_4 = arith.constant 0 : index
    %26 = vector.load %arg2[%c0_3, %c0_4] : memref<24x64xf32, #tpu.memory_space<vmem>>, vector<24x64xf32>
    %cst_5 = arith.constant dense<0.000000e+00> : vector<8x64xf32>
    %27 = tpu.matmul %25, %26, %cst_5 {dimension_numbers = #tpu.dot_dimension_numbers<[1], [0], [0], [1], [0, 0, 1, 1], [], []>} : vector<8x24xf32>, vector<24x64xf32>, vector<8x64xf32> -> vector<8x64xf32>
    %c0_6 = arith.constant 0 : index
    %c0_7 = arith.constant 0 : index
    %28 = vector.load %arg3[%c0_6, %c0_7] : memref<1x64xf32, #tpu.memory_space<vmem>>, vector<1x64xf32>
    %29 = vector.broadcast %28 : vector<1x64xf32> to vector<8x64xf32>
    %30 = arith.addf %27, %29 : vector<8x64xf32>
    %cst_8 = arith.constant 0.000000e+00 : f32
    %31 = vector.broadcast %cst_8 : f32 to vector<8x64xf32>
    %32 = arith.cmpf ogt, %30, %31 : vector<8x64xf32>
    %cst_9 = arith.constant 1.000000e-01 : f32
    %33 = vector.broadcast %cst_9 : f32 to vector<8x64xf32>
    %34 = arith.mulf %33, %30 : vector<8x64xf32>
    %35 = arith.select %32, %30, %34 : vector<8x64xi1>, vector<8x64xf32>
    %c0_10 = arith.constant 0 : index
    %c0_11 = arith.constant 0 : index
    %36 = vector.load %arg4[%c0_10, %c0_11] : memref<64x128xf32, #tpu.memory_space<vmem>>, vector<64x128xf32>
    %cst_12 = arith.constant dense<0.000000e+00> : vector<8x128xf32>
    %37 = tpu.matmul %35, %36, %cst_12 {dimension_numbers = #tpu.dot_dimension_numbers<[1], [0], [0], [1], [0, 0, 1, 1], [], []>} : vector<8x64xf32>, vector<64x128xf32>, vector<8x128xf32> -> vector<8x128xf32>
    %c0_13 = arith.constant 0 : index
    %c0_14 = arith.constant 0 : index
    %38 = vector.load %arg5[%c0_13, %c0_14] : memref<1x128xf32, #tpu.memory_space<vmem>>, vector<1x128xf32>
    %39 = vector.broadcast %38 : vector<1x128xf32> to vector<8x128xf32>
    %40 = arith.addf %37, %39 : vector<8x128xf32>
    %c0_15 = arith.constant 0 : index
    %c0_16 = arith.constant 0 : index
    %41 = vector.load %arg6[%c0_15, %c0_16] : memref<8x128xf32, #tpu.memory_space<vmem>>, vector<8x128xf32>
    tpu.vector_store %arg6[%c0_15, %c0_16], %40 {strides = array<i32>} : memref<8x128xf32, #tpu.memory_space<vmem>>, vector<8x128xf32>,
    return
  }
  func.func @transform_0(%arg0: i32) -> (i32, i32) {
    %c0_i32 = arith.constant 0 : i32
    %c0_i32_0 = arith.constant 0 : i32
    return %arg0, %c0_i32 : i32, i32
  }
  func.func @transform_1(%arg0: i32) -> (i32, i32) {
    %c0_i32 = arith.constant 0 : i32
    %c0_i32_0 = arith.constant 0 : i32
    %c0_i32_1 = arith.constant 0 : i32
    return %c0_i32, %c0_i32_0 : i32, i32
  }
  func.func @transform_2(%arg0: i32) -> (i32, i32) {
    %c0_i32 = arith.constant 0 : i32
    %c0_i32_0 = arith.constant 0 : i32
    %c0_i32_1 = arith.constant 0 : i32
    return %c0_i32, %c0_i32_0 : i32, i32
  }
  func.func @transform_3(%arg0: i32) -> (i32, i32) {
    %c0_i32 = arith.constant 0 : i32
    %c0_i32_0 = arith.constant 0 : i32
    %c0_i32_1 = arith.constant 0 : i32
    return %c0_i32, %c0_i32_0 : i32, i32
  }
  func.func @transform_4(%arg0: i32) -> (i32, i32) {
    %c0_i32 = arith.constant 0 : i32
    %c0_i32_0 = arith.constant 0 : i32
    %c0_i32_1 = arith.constant 0 : i32
    return %c0_i32, %c0_i32_0 : i32, i32
  }
  func.func @transform_5(%arg0: i32) -> (i32, i32) {
    %c0_i32 = arith.constant 0 : i32
    %c0_i32_0 = arith.constant 0 : i32
    return %arg0, %c0_i32 : i32, i32
  }
}

</mosaic_0001>

<llo_original>
// kernel: tpu_custom_call.1
$region0: #{tpu_custom_call.1}
  #allocation0 [shape = 'u32[]', space=smem, size = 0x4, offset = 0x4, fixed_abs, tag = 'smem constant byte address 0x4 - core index']
  #allocation1 [shape = 'u32[144,128]{1,0:T(1,128)}', space=vmem, size = 0x12000, scoped, tag = 'internal scratch']
  %s0 = inlined_call_operand.vmem [shape: s32[16,3], index: 0, kind: input, shape index: {}]
  %s1 = inlined_call_operand.hbm [shape: f32[24,64], index: 1, kind: input, shape index: {}]
  %s2 = inlined_call_operand.vmem [shape: f32[1,64], index: 2, kind: input, shape index: {}]
  %s3 = inlined_call_operand.hbm [shape: f32[64,128], index: 3, kind: input, shape index: {}]
  %s4 = inlined_call_operand.vmem [shape: f32[1,128], index: 4, kind: input, shape index: {}]
  %s5 = inlined_call_operand.hbm [shape: f32[16,128], index: 5, kind: output, shape index: {}]
  %s6 = sld [smem:[#allocation0]]
  $region61: #{tpu_custom_call.1} parent=0
    _
  %s8 = ssub.s32 1, %s6
  %s9 = scalar_select 0, %s8, %s6
  $region1: #{tpu_custom_call.1} parent=0
    #allocation2 [shape = 'u8[12288]{0}', space=vmem, size = 0x3000, scoped, tag = 'input window, operand 1, single buffered']
    #allocation3 [shape = 's32[2]{0}', space=sflag, size = 0x8, scoped, tag = 'scoped memory for tpu_custom_call.1']
    #allocation4 [shape = 's32[2]{0}', space=sflag, size = 0x8, scoped, tag = 'scoped memory for tpu_custom_call.1']
    #allocation5 [shape = 'u8[32768]{0}', space=vmem, size = 0x8000, scoped, tag = 'input window, operand 3, single buffered']
    #allocation6 [shape = 's32[1]{0}', space=sflag, size = 0x4, scoped, tag = 'scoped memory for tpu_custom_call.1']
    #allocation7 [shape = 'u8[8192]{0}', space=vmem, size = 0x2000, scoped, tag = 'output window, operand 0']
    %10 = vsyncpa [#allocation3], 0
    %11 = vsyncpa [#allocation6], 0
    %12 = vsyncpa [#allocation4], 0
    %s13 = scalar_lea.sflag [#allocation4], 1
    %14 = vsyncpa %s13, 0
    loop: start=0, step=1, limit=4
    $region2: #{tpu_custom_call.1} parent=1 // loop_pre_header
      _
    $region3: #{tpu_custom_call.1} parent=1 // loop_header
      %s16 = sphi 0, %s20
      %p17 = scmp.ge.s32.totalorder %s16, 4
      %s26 = sphi 0, %s28
      %s29 = sphi 0, %s26
      %s30 = sphi 0, %s29
      %s46 = sphi 0, %s30
      %s50 = sphi 0, %s50
      %s52 = sphi 0, %s50
      %s53 = sphi 0, %s52
      %s67 = sphi 0, %s53
      %s71 = sphi 0, %s71
      %s73 = sphi 0, %s71
      %s74 = sphi 0, %s73
      %s88 = sphi 0, %s74
      %s92 = sphi 0, %s92
      %s94 = sphi 0, %s92
      %s95 = sphi 0, %s94
      %s109 = sphi 0, %s95
      %s113 = sphi 0, %s113
      %s115 = sphi 0, %s113
      %s116 = sphi 0, %s115
      %s130 = sphi 0, %s116
      %s136 = sphi 0, %s138
      %s139 = sphi 0, %s136
      %s140 = sphi 0, %s139
      %s156 = sphi 0, %s140
    $region4: #{tpu_custom_call.1} parent=1 // loop_header_branch
      %19 = sbr.rel (%p17) target = $region8
    $region5: #{tpu_custom_call.1} parent=1 // loop_body
      %s21 = ssub.s32 %s16, 1
      %s22 = ssub.s32 %s16, 2
      %s23 = sadd.s32 %s16, 1
      %s24 = ssub.s32 %s16, %s23
      %p25 = scmp.eq.s32.totalorder %s24, 0
      %s27 = sadd.s32 %s26, 1
      %s28 = scalar_select %p25, %s26, %s27
      %p31 = pneg %p25
      %p32 = scmp.eq.s32.totalorder %s16, 1
      %p33 = por %p31, %p32
      %p34 = scmp.ne.s32.totalorder %s26, %s29
      %p35 = scmp.eq.s32.totalorder %s16, 0
      %p36 = por %p34, %p35
      %p37 = scmp.ne.s32.totalorder %s26, %s29
      %p38 = scmp.eq.s32.totalorder %s21, 1
      %p39 = por %p37, %p38
      %p40 = scmp.ne.s32.totalorder %s29, %s30
      %p41 = scmp.eq.s32.totalorder %s21, 0
      %p42 = por %p40, %p41
      %p43 = scmp.ne.s32.totalorder %s29, %s30
      %p44 = scmp.eq.s32.totalorder %s22, 1
      %p45 = por %p43, %p44
      %p47 = scmp.ne.s32.totalorder %s30, %s46
      %p48 = scmp.eq.s32.totalorder %s22, 0
      %p49 = por %p47, %p48
      %s51 = sadd.s32 %s50, 1
      %p54 = scmp.eq.s32.totalorder %s16, 1
      %p55 = scmp.ne.s32.totalorder %s50, %s52
      %p56 = scmp.eq.s32.totalorder %s16, 0
      %p57 = por %p55, %p56
      %p58 = scmp.ne.s32.totalorder %s50, %s52
      %p59 = scmp.eq.s32.totalorder %s21, 1
      %p60 = por %p58, %p59
      %p61 = scmp.ne.s32.totalorder %s52, %s53
      %p62 = scmp.eq.s32.totalorder %s21, 0
      %p63 = por %p61, %p62
      %p64 = scmp.ne.s32.totalorder %s52, %s53
      %p65 = scmp.eq.s32.totalorder %s22, 1
      %p66 = por %p64, %p65
      %p68 = scmp.ne.s32.totalorder %s53, %s67
      %p69 = scmp.eq.s32.totalorder %s22, 0
      %p70 = por %p68, %p69
      %s72 = sadd.s32 %s71, 1
      %p75 = scmp.eq.s32.totalorder %s16, 1
      %p76 = scmp.ne.s32.totalorder %s71, %s73
      %p77 = scmp.eq.s32.totalorder %s16, 0
      %p78 = por %p76, %p77
      %p79 = scmp.ne.s32.totalorder %s71, %s73
      %p80 = scmp.eq.s32.totalorder %s21, 1
      %p81 = por %p79, %p80
      %p82 = scmp.ne.s32.totalorder %s73, %s74
      %p83 = scmp.eq.s32.totalorder %s21, 0
      %p84 = por %p82, %p83
      %p85 = scmp.ne.s32.totalorder %s73, %s74
      %p86 = scmp.eq.s32.totalorder %s22, 1
      %p87 = por %p85, %p86
      %p89 = scmp.ne.s32.totalorder %s74, %s88
      %p90 = scmp.eq.s32.totalorder %s22, 0
      %p91 = por %p89, %p90
      %s93 = sadd.s32 %s92, 1
      %p96 = scmp.eq.s32.totalorder %s16, 1
      %p97 = scmp.ne.s32.totalorder %s92, %s94
      %p98 = scmp.eq.s32.totalorder %s16, 0
      %p99 = por %p97, %p98
      %p100 = scmp.ne.s32.totalorder %s92, %s94
      %p101 = scmp.eq.s32.totalorder %s21, 1
      %p102 = por %p100, %p101
      %p103 = scmp.ne.s32.totalorder %s94, %s95
      %p104 = scmp.eq.s32.totalorder %s21, 0
      %p105 = por %p103, %p104
      %p106 = scmp.ne.s32.totalorder %s94, %s95
      %p107 = scmp.eq.s32.totalorder %s22, 1
      %p108 = por %p106, %p107
      %p110 = scmp.ne.s32.totalorder %s95, %s109
      %p111 = scmp.eq.s32.totalorder %s22, 0
      %p112 = por %p110, %p111
      %s114 = sadd.s32 %s113, 1
      %p117 = scmp.eq.s32.totalorder %s16, 1
      %p118 = scmp.ne.s32.totalorder %s113, %s115
      %p119 = scmp.eq.s32.totalorder %s16, 0
      %p120 = por %p118, %p119
      %p121 = scmp.ne.s32.totalorder %s113, %s115
      %p122 = scmp.eq.s32.totalorder %s21, 1
      %p123 = por %p121, %p122
      %p124 = scmp.ne.s32.totalorder %s115, %s116
      %p125 = scmp.eq.s32.totalorder %s21, 0
      %p126 = por %p124, %p125
      %p127 = scmp.ne.s32.totalorder %s115, %s116
      %p128 = scmp.eq.s32.totalorder %s22, 1
      %p129 = por %p127, %p128
      %p131 = scmp.ne.s32.totalorder %s116, %s130
      %p132 = scmp.eq.s32.totalorder %s22, 0
      %p133 = por %p131, %p132
      %s134 = ssub.s32 %s16, %s23
      %p135 = scmp.eq.s32.totalorder %s134, 0
      %s137 = sadd.s32 %s136, 1
      %s138 = scalar_select %p135, %s136, %s137
      %p141 = pneg %p135
      %p142 = scmp.eq.s32.totalorder %s16, 1
      %p143 = por %p141, %p142
      %p144 = scmp.ne.s32.totalorder %s136, %s139
      %p145 = scmp.eq.s32.totalorder %s16, 0
      %p146 = por %p144, %p145
      %p147 = scmp.ne.s32.totalorder %s136, %s139
      %p148 = scmp.eq.s32.totalorder %s21, 1
      %p149 = por %p147, %p148
      %p150 = scmp.ne.s32.totalorder %s139, %s140
      %p151 = scmp.eq.s32.totalorder %s21, 0
      %p152 = por %p150, %p151
      %p153 = scmp.ne.s32.totalorder %s139, %s140
      %p154 = scmp.eq.s32.totalorder %s22, 1
      %p155 = por %p153, %p154
      %p157 = scmp.ne.s32.totalorder %s140, %s156
      %p158 = scmp.eq.s32.totalorder %s22, 0
      %p159 = por %p157, %p158
      %p160 = scmp.le.s32.totalorder 1, %s16
      %p161 = scmp.lt.s32.totalorder %s16, 3
      %p162 = pnand %p160, %p161
      %p163 = pneg %p162
      // Predicated region
      $region9: #{tpu_custom_call.1} parent=5 // pred_check
        _
      $region10: #{tpu_custom_call.1} parent=5 // pred_check_branch
        %165 = sbr.rel (%p162) target = $region12
      $region11: #{tpu_custom_call.1} parent=5 // pred_region
        %s166 = ssub.s32 %s16, 1
        // Predicated region
        $region13: #{tpu_custom_call.1} parent=11 // pred_check
          %p167 = pneg %p63
        $region14: #{tpu_custom_call.1} parent=11 // pred_check_branch
          %169 = sbr.rel (%p167) target = $region16
        $region15: #{tpu_custom_call.1} parent=11 // pred_region
          %s171 = ssub.s32 384, 384
          %172 = vsyncadd [#allocation3], %s171
          %s173 = sshll.u32 [#allocation2], 4
          %s174 = int_to_ptr.vmem [resolvable:$true] %s173
          %179 = dma.hbm_to_vmem [thread:$0]  %s1, 384, %s174, [#allocation3], 128, 128, 8
        $region16: #{tpu_custom_call.1} parent=11 // pred_fallthru
          _
        // Predicated region
        $region17: #{tpu_custom_call.1} parent=11 // pred_check
          %p180 = pneg %p84
        $region18: #{tpu_custom_call.1} parent=11 // pred_check_branch
          %182 = sbr.rel (%p180) target = $region20
        $region19: #{tpu_custom_call.1} parent=11 // pred_region
          _
        $region20: #{tpu_custom_call.1} parent=11 // pred_fallthru
          _
        // Predicated region
        $region21: #{tpu_custom_call.1} parent=11 // pred_check
          %p183 = pneg %p105
        $region22: #{tpu_custom_call.1} parent=11 // pred_check_branch
          %185 = sbr.rel (%p183) target = $region24
        $region23: #{tpu_custom_call.1} parent=11 // pred_region
          %s187 = ssub.s32 1024, 1024
          %188 = vsyncadd [#allocation6], %s187
          %s189 = sshll.u32 [#allocation5], 4
          %s190 = int_to_ptr.vmem [resolvable:$true] %s189
          %195 = dma.hbm_to_vmem [thread:$0]  %s3, 1024, %s190, [#allocation6], 128, 128, 8
        $region24: #{tpu_custom_call.1} parent=11 // pred_fallthru
          _
        // Predicated region
        $region25: #{tpu_custom_call.1} parent=11 // pred_check
          %p196 = pneg %p126
        $region26: #{tpu_custom_call.1} parent=11 // pred_check_branch
          %198 = sbr.rel (%p196) target = $region28
        $region27: #{tpu_custom_call.1} parent=11 // pred_region
          _
        $region28: #{tpu_custom_call.1} parent=11 // pred_fallthru
          _
      $region12: #{tpu_custom_call.1} parent=5 // pred_fallthru
        _
      %p199 = scmp.lt.s32.totalorder %s16, 2
      // Predicated region
      $region29: #{tpu_custom_call.1} parent=5 // pred_check
        %p200 = pneg %p199
      $region30: #{tpu_custom_call.1} parent=5 // pred_check_branch
        %202 = sbr.rel (%p200) target = $region32
      $region31: #{tpu_custom_call.1} parent=5 // pred_region
        // Predicated region
        $region33: #{tpu_custom_call.1} parent=31 // pred_check
          %p203 = pneg %p36
        $region34: #{tpu_custom_call.1} parent=31 // pred_check_branch
          %205 = sbr.rel (%p203) target = $region36
        $region35: #{tpu_custom_call.1} parent=31 // pred_region
          %p206 = scmp.lt.s32.totalorder %s16, 1
          %s207 = scalar_select %p206, %s16, 1
          %s208 = smul.addr %s207, 8
          %s209 = scalar_lea.vmem %s0, %s208
        $region36: #{tpu_custom_call.1} parent=31 // pred_fallthru
          _
      $region32: #{tpu_custom_call.1} parent=5 // pred_fallthru
        _
      %p210 = scmp.le.s32.totalorder 1, %s16
      %p211 = scmp.lt.s32.totalorder %s16, 3
      %p212 = pnand %p210, %p211
      %p213 = pneg %p212
      // Predicated region
      $region37: #{tpu_custom_call.1} parent=5 // pred_check
        _
      $region38: #{tpu_custom_call.1} parent=5 // pred_check_branch
        %215 = sbr.rel (%p212) target = $region40
      $region39: #{tpu_custom_call.1} parent=5 // pred_region
        %s216 = ssub.s32 %s16, 1
        // Predicated region
        $region41: #{tpu_custom_call.1} parent=39 // pred_check
          %p217 = pneg %p63
        $region42: #{tpu_custom_call.1} parent=39 // pred_check_branch
          %219 = sbr.rel (%p217) target = $region44
        $region43: #{tpu_custom_call.1} parent=39 // pred_region
          %220 = dma.done [#allocation3], 384
        $region44: #{tpu_custom_call.1} parent=39 // pred_fallthru
          _
        // Predicated region
        $region45: #{tpu_custom_call.1} parent=39 // pred_check
          %p221 = pneg %p105
        $region46: #{tpu_custom_call.1} parent=39 // pred_check_branch
          %223 = sbr.rel (%p221) target = $region48
        $region47: #{tpu_custom_call.1} parent=39 // pred_region
          %224 = dma.done [#allocation6], 1024
        $region48: #{tpu_custom_call.1} parent=39 // pred_fallthru
          _
        %p225 = scmp.lt.s32.totalorder %s21, 1
        %s226 = scalar_select %p225, %s21, 1
        %s227 = smul.addr %s226, 8
        %s228 = scalar_lea.vmem %s0, %s227
        %p229 = pneg %p42
        %p230 = pneg %p39
        %p231 = pneg %p63
        %p232 = pneg %p60
        %p233 = pneg %p84
        %p234 = pneg %p81
        %p235 = pneg %p105
        %p236 = pneg %p102
        %p237 = pneg %p126
        %p238 = pneg %p123
        %p239 = pneg %p152
        %p240 = pneg %p149
        %s241 = sand.u32 %s139, 1
        %s242 = scalar_lea.sflag [#allocation4], %s241
        %s243 = sand.u32 %s139, 1
        %s244 = smul.addr %s243, 8
        %s245 = scalar_lea.vmem [#allocation7], %s244
        %p246 = scmp.lt.s32.totalorder %s21, 1
        %s247 = scalar_select %p246, %s21, 1
        %s248 = smul.addr %s247, 8
        %s249 = scalar_lea.vmem %s0, %s248
        %v250 = vlaneseq
        %v251 = vand.u32 %v250, 127
        %v252 = vld [vmem:[%s249] sm:$0xff]
        %253 = vset.pattern.permute.xlu0 0
        %254 = vperm.xlu0 %253, %v252
        %v255 = vpop.permute.xlu0 %254
        %vm256 = vcmp.eq.s32.totalorder %v251, %v255
        %v257 = vsel %vm256, 1, 0
        %v258 = vcvt.s32.f32 %v257
        %v259 = vadd.f32 %v258, 0.0
        %v260 = vadd.s32 %v252, 8
        %261 = vset.pattern.permute.xlu0 1
        %262 = vperm.xlu0 %261, %v260
        %v263 = vpop.permute.xlu0 %262
        %vm264 = vcmp.eq.s32.totalorder %v251, %v263
        %v265 = vsel %vm264, 1, 0
        %v266 = vcvt.s32.f32 %v265
        %v267 = vadd.f32 %v259, %v266
        %v268 = vadd.s32 %v252, 16
        %269 = vset.pattern.permute.xlu0 2
        %270 = vperm.xlu0 %269, %v268
        %v271 = vpop.permute.xlu0 %270
        %vm272 = vcmp.eq.s32.totalorder %v251, %v271
        %v273 = vsel %vm272, 1, 0
        %v274 = vcvt.s32.f32 %v273
        %v275 = vadd.f32 %v267, %v274
        %v276 = vld [vmem:[#allocation2] sm:$0xff]
        %v277 = vld [vmem:[#allocation2 + $0x8] sm:$0xff]
        %v278 = vld [vmem:[#allocation2 + $0x10] sm:$0xff]
        %v279 = vld [vmem:[%s2] sm:$0x1]
        %v281 = vlaneseq
        %v282 = vshrl.u32 %v281, 7
        %v283 = vsub.s32 0, %v282
        %v284 = vrot.slane %v279, %v283
        %vm286 = vcmask 195584
        %v288 = vsel %vm286, %v275, 0
        %290 = vmatprep.subr.mxu0 0.0
        %291 = vmatpush1.msra.mxu0 0.0
        %292 = vmatprep.subr.mxu0 0.0
        %293 = vmatpush1.msra.mxu0 0.0
        %294 = vmatprep.subr.mxu0 0.0
        %295 = vmatpush1.msra.mxu0 0.0
        %296 = vmatprep.subr.mxu0 0.0
        %297 = vmatpush1.msra.mxu0 0.0
        %298 = vmatprep.subr.mxu0 0.0
        %299 = vmatpush1.msra.mxu0 0.0
        %300 = vmatprep.subr.mxu0 0.0
        %301 = vmatpush1.msra.mxu0 0.0
        %302 = vmatprep.subr.mxu0 0.0
        %303 = vmatpush1.msra.mxu0 0.0
        %304 = vmatprep.subr.mxu0 0.0
        %305 = vmatpush1.msra.mxu0 0.0
        %306 = vmatprep.subr.mxu0 0.0
        %307 = vmatpush1.msra.mxu0 0.0
        %308 = vmatprep.subr.mxu0 0.0
        %309 = vmatpush1.msra.mxu0 0.0
        %310 = vmatprep.subr.mxu0 0.0
        %311 = vmatpush1.msra.mxu0 0.0
        %312 = vmatprep.subr.mxu0 0.0
        %313 = vmatpush1.msra.mxu0 0.0
        %314 = vmatprep.subr.mxu0 0.0
        %315 = vmatpush1.msra.mxu0 0.0
        %316 = vmatprep.subr.mxu0 0.0
        %317 = vmatpush1.msra.mxu0 %v278
        %318 = vmatprep.subr.mxu0 0.0
        %319 = vmatpush1.msra.mxu0 %v277
        %320 = vmatprep.subr.mxu0 0.0
        %321 = vmatpush1.msra.mxu0 %v276
        %322 = vmatprep.subr.mxu0 0.0
        %323 = vmatpush2.msra.mxu0 0.0
        %324 = vmatprep.subr.mxu0 0.0
        %325 = vmatpush2.msra.mxu0 0.0
        %326 = vmatprep.subr.mxu0 0.0
        %327 = vmatpush2.msra.mxu0 0.0
        %328 = vmatprep.subr.mxu0 0.0
        %329 = vmatpush2.msra.mxu0 0.0
        %330 = vmatprep.subr.mxu0 0.0
        %331 = vmatpush2.msra.mxu0 0.0
        %332 = vmatprep.subr.mxu0 0.0
        %333 = vmatpush2.msra.mxu0 0.0
        %334 = vmatprep.subr.mxu0 0.0
        %335 = vmatpush2.msra.mxu0 0.0
        %336 = vmatprep.subr.mxu0 0.0
        %337 = vmatpush2.msra.mxu0 0.0
        %338 = vmatprep.subr.mxu0 0.0
        %339 = vmatpush2.msra.mxu0 0.0
        %340 = vmatprep.subr.mxu0 0.0
        %341 = vmatpush2.msra.mxu0 0.0
        %342 = vmatprep.subr.mxu0 0.0
        %343 = vmatpush2.msra.mxu0 0.0
        %344 = vmatprep.subr.mxu0 0.0
        %345 = vmatpush2.msra.mxu0 0.0
        %346 = vmatprep.subr.mxu0 0.0
        %347 = vmatpush2.msra.mxu0 0.0
        %348 = vmatprep.subr.mxu0 0.0
        %349 = vmatpush2.msra.mxu0 0.0
        %350 = vmatprep.subr.mxu0 0.0
        %351 = vmatpush2.msra.mxu0 0.0
        %352 = vmatprep.subr.mxu0 0.0
        %353 = vmatpush2.msra.mxu0 0.0
        %354 = vmatprep.mubr.f32.mxu0 0.0
        %355 = vmatmul.mubr.f32.gmra.mxu0 %v288
        %v356 = vpop.f32.mrf.mxu0
        %v357 = vadd.f32 %v284, %v356
        %v358 = vpop.f32.mrf.mxu0
        %359 = vdwg.mxu0
        %vm360 = vcmp.gt.f32.partialorder %v357, 0.0
        %v361 = vmul.f32 %v357, 0.1
        %v362 = vsel %vm360, %v357, %v361
        %v363 = vld [vmem:[#allocation5] sm:$0xff]
        %v364 = vld [vmem:[#allocation5 + $0x8] sm:$0xff]
        %v365 = vld [vmem:[#allocation5 + $0x10] sm:$0xff]
        %v366 = vld [vmem:[#allocation5 + $0x18] sm:$0xff]
        %v367 = vld [vmem:[#allocation5 + $0x20] sm:$0xff]
        %v368 = vld [vmem:[#allocation5 + $0x28] sm:$0xff]
        %v369 = vld [vmem:[#allocation5 + $0x30] sm:$0xff]
        %v370 = vld [vmem:[#allocation5 + $0x38] sm:$0xff]
        %v371 = vld [vmem:[%s4] sm:$0x1]
        %v373 = vlaneseq
        %v374 = vshrl.u32 %v373, 7
        %v375 = vsub.s32 0, %v374
        %v376 = vrot.slane %v371, %v375
        %vm378 = vcmask 523264
        %v380 = vsel %vm378, %v362, 0
        %382 = vmatprep.subr.mxu0 0.0
        %383 = vmatpush1.msra.mxu0 0.0
        %384 = vmatprep.subr.mxu0 0.0
        %385 = vmatpush1.msra.mxu0 0.0
        %386 = vmatprep.subr.mxu0 0.0
        %387 = vmatpush1.msra.mxu0 0.0
        %388 = vmatprep.subr.mxu0 0.0
        %389 = vmatpush1.msra.mxu0 0.0
        %390 = vmatprep.subr.mxu0 0.0
        %391 = vmatpush1.msra.mxu0 0.0
        %392 = vmatprep.subr.mxu0 0.0
        %393 = vmatpush1.msra.mxu0 0.0
        %394 = vmatprep.subr.mxu0 0.0
        %395 = vmatpush1.msra.mxu0 0.0
        %396 = vmatprep.subr.mxu0 0.0
        %397 = vmatpush1.msra.mxu0 0.0
        %398 = vmatprep.subr.mxu0 0.0
        %399 = vmatpush1.msra.mxu0 %v370
        %400 = vmatprep.subr.mxu0 0.0
        %401 = vmatpush1.msra.mxu0 %v369
        %402 = vmatprep.subr.mxu0 0.0
        %403 = vmatpush1.msra.mxu0 %v368
        %404 = vmatprep.subr.mxu0 0.0
        %405 = vmatpush1.msra.mxu0 %v367
        %406 = vmatprep.subr.mxu0 0.0
        %407 = vmatpush1.msra.mxu0 %v366
        %408 = vmatprep.subr.mxu0 0.0
        %409 = vmatpush1.msra.mxu0 %v365
        %410 = vmatprep.subr.mxu0 0.0
        %411 = vmatpush1.msra.mxu0 %v364
        %412 = vmatprep.subr.mxu0 0.0
        %413 = vmatpush1.msra.mxu0 %v363
        %414 = vmatprep.subr.mxu0 0.0
        %415 = vmatpush2.msra.mxu0 0.0
        %416 = vmatprep.subr.mxu0 0.0
        %417 = vmatpush2.msra.mxu0 0.0
        %418 = vmatprep.subr.mxu0 0.0
        %419 = vmatpush2.msra.mxu0 0.0
        %420 = vmatprep.subr.mxu0 0.0
        %421 = vmatpush2.msra.mxu0 0.0
        %422 = vmatprep.subr.mxu0 0.0
        %423 = vmatpush2.msra.mxu0 0.0
        %424 = vmatprep.subr.mxu0 0.0
        %425 = vmatpush2.msra.mxu0 0.0
        %426 = vmatprep.subr.mxu0 0.0
        %427 = vmatpush2.msra.mxu0 0.0
        %428 = vmatprep.subr.mxu0 0.0
        %429 = vmatpush2.msra.mxu0 0.0
        %430 = vmatprep.subr.mxu0 0.0
        %431 = vmatpush2.msra.mxu0 0.0
        %432 = vmatprep.subr.mxu0 0.0
        %433 = vmatpush2.msra.mxu0 0.0
        %434 = vmatprep.subr.mxu0 0.0
        %435 = vmatpush2.msra.mxu0 0.0
        %436 = vmatprep.subr.mxu0 0.0
        %437 = vmatpush2.msra.mxu0 0.0
        %438 = vmatprep.subr.mxu0 0.0
        %439 = vmatpush2.msra.mxu0 0.0
        %440 = vmatprep.subr.mxu0 0.0
        %441 = vmatpush2.msra.mxu0 0.0
        %442 = vmatprep.subr.mxu0 0.0
        %443 = vmatpush2.msra.mxu0 0.0
        %444 = vmatprep.subr.mxu0 0.0
        %445 = vmatpush2.msra.mxu0 0.0
        %446 = vmatprep.mubr.f32.mxu0 0.0
        %447 = vmatmul.mubr.f32.gmra.mxu0 %v380
        %v448 = vpop.f32.mrf.mxu0
        %v449 = vadd.f32 %v376, %v448
        %v450 = vpop.f32.mrf.mxu0
        %451 = vdwg.mxu0
        %452 = vst [vmem:[%s245] sm:$0xff] %v449
        %s453 = sand.u32 %s139, 1
        %s454 = scalar_lea.sflag [#allocation4], %s453
        %s455 = sand.u32 %s139, 1
        %s456 = smul.addr %s455, 8
        %s457 = scalar_lea.vmem [#allocation7], %s456
        // Predicated region
        $region49: #{tpu_custom_call.1} parent=39 // pred_check
          %p458 = pneg %p149
        $region50: #{tpu_custom_call.1} parent=39 // pred_check_branch
          %460 = sbr.rel (%p458) target = $region52
        $region51: #{tpu_custom_call.1} parent=39 // pred_region
          %s462 = ssub.s32 128, 128
          %463 = vsyncadd %s454, %s462
          %s464 = smul.addr %s21, 128
          %s465 = scalar_lea.hbm %s5, %s464
          %s467 = sshll.u32 %s457, 4
          %s468 = int_to_ptr.vmem [resolvable:$true] %s467
          %470 = dma.vmem_to_hbm [thread:$0]  %s468, 128, %s465, %s454
        $region52: #{tpu_custom_call.1} parent=39 // pred_fallthru
          _
      $region40: #{tpu_custom_call.1} parent=5 // pred_fallthru
        _
      %p471 = scmp.le.s32.totalorder 2, %s16
      // Predicated region
      $region53: #{tpu_custom_call.1} parent=5 // pred_check
        %p472 = pneg %p471
      $region54: #{tpu_custom_call.1} parent=5 // pred_check_branch
        %474 = sbr.rel (%p472) target = $region56
      $region55: #{tpu_custom_call.1} parent=5 // pred_region
        %s475 = ssub.s32 %s16, 2
        // Predicated region
        $region57: #{tpu_custom_call.1} parent=55 // pred_check
          %p476 = pneg %p155
        $region58: #{tpu_custom_call.1} parent=55 // pred_check_branch
          %478 = sbr.rel (%p476) target = $region60
        $region59: #{tpu_custom_call.1} parent=55 // pred_region
          %s479 = sand.u32 %s140, 1
          %s480 = scalar_lea.sflag [#allocation4], %s479
          %s481 = sand.u32 %s140, 1
          %s482 = smul.addr %s481, 8
          %s483 = scalar_lea.vmem [#allocation7], %s482
          %484 = dma.done %s480, 128
        $region60: #{tpu_custom_call.1} parent=55 // pred_fallthru
          _
      $region56: #{tpu_custom_call.1} parent=5 // pred_fallthru
        _
    $region6: #{tpu_custom_call.1} parent=1 // loop_footer
      %s20 = sadd.s32 1, %s16
    $region7: #{tpu_custom_call.1} parent=1 // loop_footer_branch
      %15 = sbr.rel target = $region3
    $region8: #{tpu_custom_call.1} parent=1 // loop_exit
      _
    %485 = vsyncpa [#allocation3], 1
    %s486 = scalar_lea.sflag [#allocation3], 1
    %487 = vsyncpa %s486, 1
    %488 = vsyncpa [#allocation6], 1
    %489 = vsyncpa [#allocation4], 1
    %s490 = scalar_lea.sflag [#allocation4], 1
    %491 = vsyncpa %s490, 1

</llo_original>
